<compile_context>
chip_gen: v6e
topology: v6e:2x2x1
jax: 0.10.0
libtpu: 0.0.40
codegen_flags: <defaults>
</compile_context>

<pallas_src>
import numpy as np
import jax
import jax.numpy as jnp
from jax.experimental import pallas as pl
from jax.experimental.pallas import tpu as pltpu

HIDDEN = 128                         # Score MLP hidden, padded to a full 128-lane vreg
BINS = (1, 2, 3, 4, 8, 16, 32, 64)   # Distance buckets (len(BINS)+1 embedding rows)

_VMEM_LIMIT = 48 * 1024 * 1024       # leave headroom under v7x's 64 MiB physical VMEM


def _round_up(x, m):
    return ((x + m - 1) // m) * m


def _pick_tile(n, tile_max):
    """Largest tile <= tile_max that still yields >= 2 grid steps when n allows it
    (v7x has 2 TensorCores; 'parallel' only shards work across them if grid >= 2)."""
    half = _round_up(max((n + 1) // 2, 8), 8)
    return max(8, min(tile_max, half))


# --------------------------- Pallas kernels -----------------------------

def _mlp_score_kernel(x_ref, w1_ref, b1_ref, w2_ref, b2_ref, w3_ref, b3_ref, o_ref):
    """Score MLP: Linear -> ReLU -> Linear -> ReLU -> Linear.
    bf16 MXU matmuls with f32 accumulation; final D->1 layer as VPU reduce."""
    x = x_ref[...].astype(jnp.bfloat16)                                    # (TN, D) bf16
    h1 = jnp.maximum(
        jnp.dot(x, w1_ref[...], preferred_element_type=jnp.float32) + b1_ref[...], 0.0)
    h2 = jnp.maximum(
        jnp.dot(h1.astype(jnp.bfloat16), w2_ref[...],
                preferred_element_type=jnp.float32) + b2_ref[...], 0.0)
    # D->1: multiply by the w3 row + lane reduce (no 1-column MXU pass).
    # (n,1) output is a masked store, but its bytes are negligible vs the (n,D) input.
    o_ref[...] = jnp.sum(h2 * w3_ref[...], axis=-1, keepdims=True) + b3_ref[...]


def _span_score_kernel(attns_ref, embeds_ref, se_ref, wd_ref,
                       w1se_ref, w1ae_ref, w1wd_ref, b1_ref,
                       w2_ref, b2_ref, w3_ref, b3_ref,
                       gi_ref, score_ref):
    """Fused: softmax span pooling -> g_i = [start_end | attn_embeds | widths(+pad)]
    (written by slice stores into a lane-dense 128-wide output) -> mention Score MLP
    with w1 split by row-blocks (no in-kernel concatenate)."""
    lmax = embeds_ref.shape[0]
    e = embeds_ref.shape[2]
    se_dim = se_ref.shape[1]

    # ---- numerically-stable softmax over the span window (f32) ----
    a = attns_ref[...]                                                     # (TS, L) f32
    a = a - jnp.max(a, axis=1, keepdims=True)
    p = jnp.exp(a)
    # exact reciprocal so attention weights sum to 1 (parity with the reference);
    # cost is one (TS,1) op per tile -- negligible.
    inv = pl.reciprocal(jnp.sum(p, axis=1, keepdims=True), approx=False)
    w = (p * inv).astype(jnp.bfloat16)                                     # (TS, L) bf16

    # ---- span pooling, unrolled over l (Lmax <= 9): bf16 multiply, f32 accumulate.
    # Each per-l slab is a 2-D (TS, E) block -- no (TS, L, E) tile blow-up / relayout.
    acc = (embeds_ref[0] * w[:, 0:1]).astype(jnp.float32)
    for l in range(1, lmax):
        acc = acc + (embeds_ref[l] * w[:, l:l + 1]).astype(jnp.float32)
    attn_embeds = acc                                                      # (TS, E) f32

    se = se_ref[...]                                                       # (TS, se_dim) f32
    wd = wd_ref[...]                                                       # (TS, wd_pad)  f32 (zero-padded cols)

    # ---- g_i: lane-dense 128-wide output, assembled by slice stores (no concat) ----
    gi_ref[:, :se_dim] = se
    gi_ref[:, se_dim:se_dim + e] = attn_embeds
    gi_ref[:, se_dim + e:] = wd

    # ---- mention Score MLP: first layer as three bf16 MXU accumulates ----
    h1 = (jnp.dot(se.astype(jnp.bfloat16), w1se_ref[...],
                  preferred_element_type=jnp.float32)
          + jnp.dot(attn_embeds.astype(jnp.bfloat16), w1ae_ref[...],
                    preferred_element_type=jnp.float32)
          + jnp.dot(wd.astype(jnp.bfloat16), w1wd_ref[...],
                    preferred_element_type=jnp.float32)
          + b1_ref[...])
    h1 = jnp.maximum(h1, 0.0)
    h2 = jnp.maximum(
        jnp.dot(h1.astype(jnp.bfloat16), w2_ref[...],
                preferred_element_type=jnp.float32) + b2_ref[...], 0.0)
    score_ref[...] = jnp.sum(h2 * w3_ref[...], axis=-1, keepdims=True) + b3_ref[...]


def _const_spec(shape):
    """Weights/biases: full-array block, resident across the grid.
    (Buffered(1) would shave a duplicate buffer, but the VMEM saving is negligible.)"""
    nd = len(shape)
    return pl.BlockSpec(shape, lambda i, _nd=nd: (0,) * _nd)


# --------------------------- kernel wrappers -----------------------------

def score_mlp(x, params, *, tile_n=1024):
    """Apply the 3-layer Score MLP row-tiled: (N, D) -> (N, 1)."""
    w1, b1, w2, b2, w3_row, b3 = params
    n, d = x.shape
    h = w1.shape[1]
    w1_bf = w1.astype(jnp.bfloat16)          # bf16 weights for the MXU
    w2_bf = w2.astype(jnp.bfloat16)

    tn = _pick_tile(n, tile_n)
    n_pad = _round_up(n, tn)
    if n_pad != n:
        x = jnp.pad(x, ((0, n_pad - n), (0, 0)))

    out = pl.pallas_call(
        _mlp_score_kernel,
        out_shape=jax.ShapeDtypeStruct((n_pad, 1), jnp.float32),
        grid=(n_pad // tn,),
        in_specs=[
            pl.BlockSpec((tn, d), lambda i: (i, 0)),
            _const_spec(w1_bf.shape), _const_spec(b1.shape),
            _const_spec(w2_bf.shape), _const_spec(b2.shape),
            _const_spec(w3_row.shape), _const_spec(b3.shape),
        ],
        out_specs=pl.BlockSpec((tn, 1), lambda i: (i, 0)),
        compiler_params=pltpu.CompilerParams(
            dimension_semantics=("parallel",),
            vmem_limit_bytes=_VMEM_LIMIT),
        cost_estimate=pl.CostEstimate(
            flops=2 * n_pad * (d * h + h * h + h),
            transcendentals=0,
            bytes_accessed=(4 * n_pad * d + 2 * (d * h + h * h)
                            + 4 * (3 * h + 1) + 4 * n_pad)),
    )(x, w1_bf, b1, w2_bf, b2, w3_row, b3)
    return out[:n]


def span_score_fused(padded_attns, padded_embeds_t, start_end, widths, params, *, tile_s=512):
    """Fused span pooling + g_i assembly + mention Score MLP, tiled over spans.

    padded_attns (S, Lmax) f32, padded_embeds_t (Lmax, S, E) bf16,
    start_end (S, 2*attn_dim) f32, widths (S, distance_dim) f32
    -> (g_i (S, gi_dim) f32, mention_scores (S, 1) f32)
    """
    w1, b1, w2, b2, w3_row, b3 = params
    s, lmax = padded_attns.shape
    e = padded_embeds_t.shape[-1]
    se_dim = start_end.shape[1]
    wd_dim = widths.shape[1]
    gi_dim = se_dim + e + wd_dim
    gi_pad = _round_up(gi_dim, 128)          # lane-dense g_i writeback
    wd_pad_dim = gi_pad - se_dim - e
    h = w1.shape[1]

    # Split w1 by row blocks (se / attn_embeds / widths) so the kernel never concatenates;
    # zero-pad the widths block so its contraction dim matches the padded widths input.
    w1_se = w1[:se_dim].astype(jnp.bfloat16)
    w1_ae = w1[se_dim:se_dim + e].astype(jnp.bfloat16)
    w1_wd = jnp.pad(w1[se_dim + e:],
                    ((0, wd_pad_dim - wd_dim), (0, 0))).astype(jnp.bfloat16)
    w2_bf = w2.astype(jnp.bfloat16)
    widths_p = jnp.pad(widths, ((0, 0), (0, wd_pad_dim - wd_dim)))

    ts = _pick_tile(s, tile_s)
    s_pad = _round_up(s, ts)
    if s_pad != s:
        pad = s_pad - s
        padded_attns = jnp.pad(padded_attns, ((0, pad), (0, 0)))
        padded_embeds_t = jnp.pad(padded_embeds_t, ((0, 0), (0, pad), (0, 0)))
        start_end = jnp.pad(start_end, ((0, pad), (0, 0)))
        widths_p = jnp.pad(widths_p, ((0, pad), (0, 0)))

    g_i, scores = pl.pallas_call(
        _span_score_kernel,
        out_shape=(jax.ShapeDtypeStruct((s_pad, gi_pad), jnp.float32),
                   jax.ShapeDtypeStruct((s_pad, 1), jnp.float32)),
        grid=(s_pad // ts,),
        in_specs=[
            pl.BlockSpec((ts, lmax), lambda i: (i, 0)),
            pl.BlockSpec((lmax, ts, e), lambda i: (0, i, 0)),
            pl.BlockSpec((ts, se_dim), lambda i: (i, 0)),
            pl.BlockSpec((ts, wd_pad_dim), lambda i: (i, 0)),
            _const_spec(w1_se.shape), _const_spec(w1_ae.shape), _const_spec(w1_wd.shape),
            _const_spec(b1.shape),
            _const_spec(w2_bf.shape), _const_spec(b2.shape),
            _const_spec(w3_row.shape), _const_spec(b3.shape),
        ],
        out_specs=(pl.BlockSpec((ts, gi_pad), lambda i: (i, 0)),
                   pl.BlockSpec((ts, 1), lambda i: (i, 0))),
        compiler_params=pltpu.CompilerParams(
            dimension_semantics=("parallel",),
            vmem_limit_bytes=_VMEM_LIMIT),
        cost_estimate=pl.CostEstimate(
            flops=2 * s_pad * (lmax * e + gi_pad * h + h * h + h),
            transcendentals=s_pad * lmax,
            bytes_accessed=(4 * s_pad * lmax + 2 * s_pad * lmax * e
                            + 4 * s_pad * (se_dim + wd_pad_dim + gi_pad + 1)
                            + 2 * (gi_pad * h + h * h) + 4 * (3 * h + 1))),
    )(padded_attns, padded_embeds_t, start_end, widths_p,
      w1_se, w1_ae, w1_wd, b1, w2_bf, b2, w3_row, b3)
    return g_i[:s, :gi_dim], scores[:s]


# ------------------------------ glue -------------------------------------

def compute_idx_spans(sent_lens, L=10):
    """All contiguous within-sentence spans up to length L-1 (corefai semantics)."""
    spans, shift = [], 0
    for n in sent_lens:
        for length in range(1, min(L, n + 1)):
            for start in range(shift, shift + n - length + 1):
                spans.append(tuple(range(start, start + length)))
        shift += n
    return spans


def mention_score_forward(states, embeds, sent_lens, params, K=250):
    attn_params, width_table, score_params = params

    spans = compute_idx_spans(sent_lens)
    starts = np.array([s[0] for s in spans], dtype=np.int32)
    ends = np.array([s[-1] for s in spans], dtype=np.int32)
    lens = ends - starts + 1
    lmax = int(lens.max())

    # 1) token-level attention logits: Score(attn_dim)  -- tiled Pallas MLP kernel
    attns = score_mlp(states, attn_params)                                 # (T, 1)

    # 2) gather + pad span windows (static indices -> plain JAX glue).
    # Embeds are laid out L-major (Lmax, S, E) and streamed as bf16 so each per-l slab
    # is a lane-dense 2-D block in the kernel.
    # TODO(synk): at realistic T, gather embeds rows inside the span kernel via
    # PrefetchScalarGridSpec / an in-kernel index block to avoid the Lmax-x blow-up of
    # padded_embeds in HBM (and fold the (T,1) attns intermediate in too).
    idx = np.minimum(starts[:, None] + np.arange(lmax)[None, :], ends[:, None])   # (S, Lmax)
    valid = np.arange(lmax)[None, :] < lens[:, None]
    idx_j = jnp.asarray(idx)
    valid_j = jnp.asarray(valid)
    padded_attns = jnp.where(valid_j, attns[idx_j, 0], jnp.float32(-1e10))        # (S, Lmax) f32
    padded_embeds_t = jnp.where(jnp.asarray(valid.T)[:, :, None],
                                embeds[jnp.asarray(idx.T)], 0.0)                  # (Lmax, S, E)
    padded_embeds_t = padded_embeds_t.astype(jnp.bfloat16)   # halve streamed HBM bytes

    # 3) Distance(width) bucket embedding (static buckets -> table lookup glue)
    buckets = np.array([sum(1 for b in BINS if int(l) >= b) for l in lens], dtype=np.int32)
    widths = width_table[jnp.asarray(buckets)]                                    # (S, distance_dim)

    # 4) start/end hidden-state concat (static gather glue)
    start_end = jnp.concatenate(
        [states[jnp.asarray(starts)], states[jnp.asarray(ends)]], axis=1)         # (S, 2*attn_dim)

    # 5) fused: softmax span pooling + g_i assembly + mention Score MLP  -- one Pallas kernel
    g_i, mention_scores = span_score_fused(
        padded_attns, padded_embeds_t, start_end, widths, score_params)           # (S, gi), (S, 1)

    # TODO(synk): Span attrs-object construction, prune() (sort + overlap removal,
    # data-dependent output size) and the yi antecedent-window lists are host-side
    # Python list manipulation with no Pallas equivalent; returning tensors only.
    return spans, g_i, mention_scores


def init_score_params(key, in_dim, hidden=HIDDEN):
    """Score MLP params; w3 stored as a (1, hidden) row for the VPU-reduce final layer."""
    k1, k2, k3 = jax.random.split(key, 3)
    w1 = jax.random.normal(k1, (in_dim, hidden), jnp.float32) * 0.1
    b1 = jnp.zeros((1, hidden), jnp.float32)
    w2 = jax.random.normal(k2, (hidden, hidden), jnp.float32) * 0.1
    b2 = jnp.zeros((1, hidden), jnp.float32)
    w3_row = jax.random.normal(k3, (1, hidden), jnp.float32) * 0.1
    b3 = jnp.zeros((1, 1), jnp.float32)
    return (w1, b1, w2, b2, w3_row, b3)


if __name__ == "__main__":
    key = jax.random.PRNGKey(0)
    ks = jax.random.split(key, 5)

    attn_dim, embed_dim, distance_dim = 32, 32, 16
    gi_dim = 2 * attn_dim + embed_dim + distance_dim          # 112
    sent_lens = [4, 4]                                        # tiny 2-sentence "doc"
    T = sum(sent_lens)

    states = jax.random.normal(ks[0], (T, attn_dim), jnp.float32)
    embeds = jax.random.normal(ks[1], (T, embed_dim), jnp.float32)

    attn_params = init_score_params(ks[2], attn_dim)          # self.attention = Score(attn_dim)
    score_params = init_score_params(ks[3], gi_dim)           # self.score     = Score(gi_dim)
    width_table = jax.random.normal(                          # self.width = Distance(distance_dim)
        ks[4], (len(BINS) + 1, distance_dim), jnp.float32) * 0.1

    spans, g_i, mention_scores = mention_score_forward(
        states, embeds, sent_lens, (attn_params, width_table, score_params))

    jax.block_until_ready(g_i)
    jax.block_until_ready(mention_scores)
    assert g_i.shape == (len(spans), gi_dim)
    assert mention_scores.shape == (len(spans), 1)
    assert bool(jnp.all(jnp.isfinite(g_i)))
    assert bool(jnp.all(jnp.isfinite(mention_scores)))
    print("KERNEL_OK")
</pallas_src>

<mosaic_0001>
module attributes {stable_mosaic.version = 11 : i64} {
  func.func @_mlp_score_kernel(%arg0: i32, %arg1: memref<8x32xf32, #tpu.memory_space<vmem>>, %arg2: memref<32x128xbf16, #tpu.memory_space<vmem>>, %arg3: memref<1x128xf32, #tpu.memory_space<vmem>>, %arg4: memref<128x128xbf16, #tpu.memory_space<vmem>>, %arg5: memref<1x128xf32, #tpu.memory_space<vmem>>, %arg6: memref<1x128xf32, #tpu.memory_space<vmem>>, %arg7: memref<1x1xf32, #tpu.memory_space<vmem>>, %arg8: memref<8x1xf32, #tpu.memory_space<vmem>>) attributes {dimension_semantics = [#tpu.dimension_semantics<parallel>], iteration_bounds = array<i64: 1>, scalar_prefetch = 0 : i64, scratch_operands = 0 : i64, tpu.core_type = #tpu.core_type<tc>, window_params = [{transform_indices = @transform_0, window_bounds = array<i64: 8, 32>}, {pipeline_mode = #tpu.pipeline_mode<synchronous>, transform_indices = @transform_1, window_bounds = array<i64: 32, 128>}, {pipeline_mode = #tpu.pipeline_mode<synchronous>, transform_indices = @transform_2, window_bounds = array<i64: 1, 128>}, {pipeline_mode = #tpu.pipeline_mode<synchronous>, transform_indices = @transform_3, window_bounds = array<i64: 128, 128>}, {pipeline_mode = #tpu.pipeline_mode<synchronous>, transform_indices = @transform_4, window_bounds = array<i64: 1, 128>}, {pipeline_mode = #tpu.pipeline_mode<synchronous>, transform_indices = @transform_5, window_bounds = array<i64: 1, 128>}, {pipeline_mode = #tpu.pipeline_mode<synchronous>, transform_indices = @transform_6, window_bounds = array<i64: 1, 1>}, {transform_indices = @transform_7, window_bounds = array<i64: 8, 1>}]} {
    %c0 = arith.constant 0 : index
    %c0_0 = arith.constant 0 : index
    %0 = vector.load %arg1[%c0, %c0_0] : memref<8x32xf32, #tpu.memory_space<vmem>>, vector<8x32xf32>
    %1 = arith.truncf %0 : vector<8x32xf32> to vector<8x32xbf16>
    %c0_1 = arith.constant 0 : index
    %c0_2 = arith.constant 0 : index
    %2 = vector.load %arg2[%c0_1, %c0_2] : memref<32x128xbf16, #tpu.memory_space<vmem>>, vector<32x128xbf16>
    %cst = arith.constant dense<0.000000e+00> : vector<8x128xf32>
    %3 = tpu.matmul %1, %2, %cst {dimension_numbers = #tpu.dot_dimension_numbers<[1], [0], [0], [1], [0, 0, 1, 1], [], []>} : vector<8x32xbf16>, vector<32x128xbf16>, vector<8x128xf32> -> vector<8x128xf32>
    %c0_3 = arith.constant 0 : index
    %c0_4 = arith.constant 0 : index
    %4 = vector.load %arg3[%c0_3, %c0_4] : memref<1x128xf32, #tpu.memory_space<vmem>>, vector<1x128xf32>
    %5 = vector.broadcast %4 : vector<1x128xf32> to vector<8x128xf32>
    %6 = arith.addf %3, %5 : vector<8x128xf32>
    %cst_5 = arith.constant 0.000000e+00 : f32
    %7 = vector.broadcast %cst_5 : f32 to vector<8x128xf32>
    %8 = arith.maximumf %6, %7 : vector<8x128xf32>
    %9 = arith.truncf %8 : vector<8x128xf32> to vector<8x128xbf16>
    %c0_6 = arith.constant 0 : index
    %c0_7 = arith.constant 0 : index
    %10 = vector.load %arg4[%c0_6, %c0_7] : memref<128x128xbf16, #tpu.memory_space<vmem>>, vector<128x128xbf16>
    %cst_8 = arith.constant dense<0.000000e+00> : vector<8x128xf32>
    %11 = tpu.matmul %9, %10, %cst_8 {dimension_numbers = #tpu.dot_dimension_numbers<[1], [0], [0], [1], [0, 0, 1, 1], [], []>} : vector<8x128xbf16>, vector<128x128xbf16>, vector<8x128xf32> -> vector<8x128xf32>
    %c0_9 = arith.constant 0 : index
    %c0_10 = arith.constant 0 : index
    %12 = vector.load %arg5[%c0_9, %c0_10] : memref<1x128xf32, #tpu.memory_space<vmem>>, vector<1x128xf32>
    %13 = vector.broadcast %12 : vector<1x128xf32> to vector<8x128xf32>
    %14 = arith.addf %11, %13 : vector<8x128xf32>
    %cst_11 = arith.constant 0.000000e+00 : f32
    %15 = vector.broadcast %cst_11 : f32 to vector<8x128xf32>
    %16 = arith.maximumf %14, %15 : vector<8x128xf32>
    %c0_12 = arith.constant 0 : index
    %c0_13 = arith.constant 0 : index
    %17 = vector.load %arg6[%c0_12, %c0_13] : memref<1x128xf32, #tpu.memory_space<vmem>>, vector<1x128xf32>
    %18 = vector.broadcast %17 : vector<1x128xf32> to vector<8x128xf32>
    %19 = arith.mulf %16, %18 : vector<8x128xf32>
    %cst_14 = arith.constant dense<0.000000e+00> : vector<8xf32>
    %20 = vector.multi_reduction <add>, %19, %cst_14 [1] : vector<8x128xf32> to vector<8xf32>
    %21 = vector.shape_cast %20 : vector<8xf32> to vector<8x1xf32>
    %c0_15 = arith.constant 0 : index
    %c0_16 = arith.constant 0 : index
    %22 = vector.load %arg7[%c0_15, %c0_16] : memref<1x1xf32, #tpu.memory_space<vmem>>, vector<1x1xf32>
    %23 = vector.broadcast %22 : vector<1x1xf32> to vector<8x1xf32>
    %24 = arith.addf %21, %23 : vector<8x1xf32>
    %c0_17 = arith.constant 0 : index
    %c0_18 = arith.constant 0 : index
    %25 = vector.load %arg8[%c0_17, %c0_18] : memref<8x1xf32, #tpu.memory_space<vmem>>, vector<8x1xf32>
    tpu.vector_store %arg8[%c0_17, %c0_18], %24 {strides = array<i32>} : memref<8x1xf32, #tpu.memory_space<vmem>>, vector<8x1xf32>,
    return
  }
  func.func @transform_0(%arg0: i32) -> (i32, i32) {
    %c0_i32 = arith.constant 0 : i32
    %c0_i32_0 = arith.constant 0 : i32
    return %arg0, %c0_i32 : i32, i32
  }
  func.func @transform_1(%arg0: i32) -> (i32, i32) {
    %c0_i32 = arith.constant 0 : i32
    %c0_i32_0 = arith.constant 0 : i32
    %c0_i32_1 = arith.constant 0 : i32
    return %c0_i32, %c0_i32_0 : i32, i32
  }
  func.func @transform_2(%arg0: i32) -> (i32, i32) {
    %c0_i32 = arith.constant 0 : i32
    %c0_i32_0 = arith.constant 0 : i32
    %c0_i32_1 = arith.constant 0 : i32
    return %c0_i32, %c0_i32_0 : i32, i32
  }
  func.func @transform_3(%arg0: i32) -> (i32, i32) {
    %c0_i32 = arith.constant 0 : i32
    %c0_i32_0 = arith.constant 0 : i32
    %c0_i32_1 = arith.constant 0 : i32
    return %c0_i32, %c0_i32_0 : i32, i32
  }
  func.func @transform_4(%arg0: i32) -> (i32, i32) {
    %c0_i32 = arith.constant 0 : i32
    %c0_i32_0 = arith.constant 0 : i32
    %c0_i32_1 = arith.constant 0 : i32
    return %c0_i32, %c0_i32_0 : i32, i32
  }
  func.func @transform_5(%arg0: i32) -> (i32, i32) {
    %c0_i32 = arith.constant 0 : i32
    %c0_i32_0 = arith.constant 0 : i32
    %c0_i32_1 = arith.constant 0 : i32
    return %c0_i32, %c0_i32_0 : i32, i32
  }
  func.func @transform_6(%arg0: i32) -> (i32, i32) {
    %c0_i32 = arith.constant 0 : i32
    %c0_i32_0 = arith.constant 0 : i32
    %c0_i32_1 = arith.constant 0 : i32
    return %c0_i32, %c0_i32_0 : i32, i32
  }
  func.func @transform_7(%arg0: i32) -> (i32, i32) {
    %c0_i32 = arith.constant 0 : i32
    %c0_i32_0 = arith.constant 0 : i32
    return %arg0, %c0_i32 : i32, i32
  }
}

</mosaic_0001>

<llo_original>
// kernel: tpu_custom_call.1
$region0: #{tpu_custom_call.1}
  #allocation0 [shape = 'u32[]', space=smem, size = 0x4, offset = 0x4, fixed_abs, tag = 'smem constant byte address 0x4 - core index']
  #allocation1 [shape = 'u32[144,128]{1,0:T(1,128)}', space=vmem, size = 0x12000, scoped, tag = 'internal scratch']
  #allocation2 [shape = 'f32[1,1]{1,0:T(1,128)S(1)}', space=vmem, size = 0x200, scoped, tag = 'scoped memory for tpu_custom_call.1']
  %s0 = inlined_call_operand.hbm [shape: f32[8,32], index: 0, kind: input, shape index: {}]
  %s1 = inlined_call_operand.hbm [shape: bf16[32,128], index: 1, kind: input, shape index: {}]
  %s2 = inlined_call_operand.vmem [shape: f32[1,128], index: 2, kind: input, shape index: {}]
  %s3 = inlined_call_operand.hbm [shape: bf16[128,128], index: 3, kind: input, shape index: {}]
  %s4 = inlined_call_operand.vmem [shape: f32[1,128], index: 4, kind: input, shape index: {}]
  %s5 = inlined_call_operand.vmem [shape: f32[1,128], index: 5, kind: input, shape index: {}]
  %s6 = inlined_call_operand.<no memory space> [shape: f32[1,1], index: 6, kind: input, shape index: {}]
  %s7 = inlined_call_operand.vmem [shape: f32[8,1], index: 7, kind: output, shape index: {}]
  %s8 = sld [smem:[#allocation0]]
  $region50: #{tpu_custom_call.1} parent=0
    _
  %s10 = ssub.s32 1, %s8
  %s11 = scalar_select 0, %s10, %s8
  %v12 = vstv %s6
  %13 = vst [vmem:[#allocation2] sm:$0x1] %v12
  $region1: #{tpu_custom_call.1} parent=0
    #allocation3 [shape = 'u8[4096]{0}', space=vmem, size = 0x1000, scoped, tag = 'input window, operand 0, single buffered']
    #allocation4 [shape = 's32[1]{0}', space=sflag, size = 0x4, scoped, tag = 'scoped memory for tpu_custom_call.1']
    #allocation5 [shape = 'u8[8192]{0}', space=vmem, size = 0x2000, scoped, tag = 'input window, operand 1, single buffered']
    #allocation6 [shape = 's32[1]{0}', space=sflag, size = 0x4, scoped, tag = 'scoped memory for tpu_custom_call.1']
    #allocation7 [shape = 'u8[32768]{0}', space=vmem, size = 0x8000, scoped, tag = 'input window, operand 3, single buffered']
    %14 = vsyncpa [#allocation4], 0
    %15 = vsyncpa [#allocation6], 0
    // Predicated region
    $region2: #{tpu_custom_call.1} parent=1 // pred_check
      _
    $region3: #{tpu_custom_call.1} parent=1 // pred_check_branch
      %17 = sbr.rel (0) target = $region5
    $region4: #{tpu_custom_call.1} parent=1 // pred_region
      %s19 = ssub.s32 128, 128
      %20 = vsyncadd [#allocation4], %s19
      %s22 = sshll.u32 [#allocation3], 4
      %s23 = int_to_ptr.vmem [resolvable:$true] %s22
      %25 = dma.hbm_to_vmem [thread:$0]  %s0, 128, %s23, [#allocation4]
    $region5: #{tpu_custom_call.1} parent=1 // pred_fallthru
      _
    // Predicated region
    $region6: #{tpu_custom_call.1} parent=1 // pred_check
      _
    $region7: #{tpu_custom_call.1} parent=1 // pred_check_branch
      %27 = sbr.rel (0) target = $region9
    $region8: #{tpu_custom_call.1} parent=1 // pred_region
      %s29 = ssub.s32 256, 256
      %30 = vsyncadd [#allocation6], %s29
      %s31 = sshll.u32 [#allocation5], 4
      %s32 = int_to_ptr.vmem [resolvable:$true] %s31
      %37 = dma.hbm_to_vmem [thread:$0]  %s1, 256, %s32, [#allocation6], 64, 64, 4
    $region9: #{tpu_custom_call.1} parent=1 // pred_fallthru
      _
    // Predicated region
    $region10: #{tpu_custom_call.1} parent=1 // pred_check
      _
    $region11: #{tpu_custom_call.1} parent=1 // pred_check_branch
      %39 = sbr.rel (0) target = $region13
    $region12: #{tpu_custom_call.1} parent=1 // pred_region
      _
    $region13: #{tpu_custom_call.1} parent=1 // pred_fallthru
      _
    // Predicated region
    $region14: #{tpu_custom_call.1} parent=1 // pred_check
      _
    $region15: #{tpu_custom_call.1} parent=1 // pred_check_branch
      %41 = sbr.rel (0) target = $region17
    $region16: #{tpu_custom_call.1} parent=1 // pred_region
      %s43 = ssub.s32 1024, 1024
      %44 = vsyncadd [#allocation6], %s43
      %s45 = sshll.u32 [#allocation7], 4
      %s46 = int_to_ptr.vmem [resolvable:$true] %s45
      %51 = dma.hbm_to_vmem [thread:$0]  %s3, 1024, %s46, [#allocation6], 64, 64, 4
    $region17: #{tpu_custom_call.1} parent=1 // pred_fallthru
      _
    // Predicated region
    $region18: #{tpu_custom_call.1} parent=1 // pred_check
      _
    $region19: #{tpu_custom_call.1} parent=1 // pred_check_branch
      %53 = sbr.rel (0) target = $region21
    $region20: #{tpu_custom_call.1} parent=1 // pred_region
      _
    $region21: #{tpu_custom_call.1} parent=1 // pred_fallthru
      _
    // Predicated region
    $region22: #{tpu_custom_call.1} parent=1 // pred_check
      _
    $region23: #{tpu_custom_call.1} parent=1 // pred_check_branch
      %55 = sbr.rel (0) target = $region25
    $region24: #{tpu_custom_call.1} parent=1 // pred_region
      _
    $region25: #{tpu_custom_call.1} parent=1 // pred_fallthru
      _
    // Predicated region
    $region26: #{tpu_custom_call.1} parent=1 // pred_check
      _
    $region27: #{tpu_custom_call.1} parent=1 // pred_check_branch
      %57 = sbr.rel (0) target = $region29
    $region28: #{tpu_custom_call.1} parent=1 // pred_region
      _
    $region29: #{tpu_custom_call.1} parent=1 // pred_fallthru
      _
    // Predicated region
    $region30: #{tpu_custom_call.1} parent=1 // pred_check
      _
    $region31: #{tpu_custom_call.1} parent=1 // pred_check_branch
      %59 = sbr.rel (0) target = $region33
    $region32: #{tpu_custom_call.1} parent=1 // pred_region
      %60 = dma.done [#allocation4], 128
    $region33: #{tpu_custom_call.1} parent=1 // pred_fallthru
      _
    // Predicated region
    $region34: #{tpu_custom_call.1} parent=1 // pred_check
      _
    $region35: #{tpu_custom_call.1} parent=1 // pred_check_branch
      %62 = sbr.rel (0) target = $region37
    $region36: #{tpu_custom_call.1} parent=1 // pred_region
      %63 = dma.done [#allocation6], 256
    $region37: #{tpu_custom_call.1} parent=1 // pred_fallthru
      _
    // Predicated region
    $region38: #{tpu_custom_call.1} parent=1 // pred_check
      _
    $region39: #{tpu_custom_call.1} parent=1 // pred_check_branch
      %65 = sbr.rel (0) target = $region41
    $region40: #{tpu_custom_call.1} parent=1 // pred_region
      %66 = dma.done [#allocation6], 1024
    $region41: #{tpu_custom_call.1} parent=1 // pred_fallthru
      _
    %v68 = vld [vmem:[#allocation3] sm:$0xff]
    %v69 = vpack.c.bf16 %v68, %v68
    %v70 = vld [vmem:[#allocation5] sm:$0xf]
    %v71 = vld [vmem:[#allocation5 + $0x4] sm:$0xf]
    %v72 = vld [vmem:[#allocation5 + $0x8] sm:$0xf]
    %v73 = vld [vmem:[#allocation5 + $0xc] sm:$0xf]
    %v74 = vld [vmem:[%s2] sm:$0x1]
    %v76 = vlaneseq
    %v77 = vshrl.u32 %v76, 7
    %v78 = vsub.s32 0, %v77
    %v79 = vrot.slane %v74, %v78
    %v85 = vunpack.c.l.b16 %v70
    %v86 = vunpack.c.l.b16 %v71
    %v87 = vunpack.c.l.b16 %v72
    %v88 = vunpack.c.l.b16 %v73
    %v89 = vpack.c.b16 %v86, %v85
    %v90 = vpack.c.b16 %v88, %v87
    %vm93 = vcmask 261120
    %v95 = vsel %vm93, %v69, 0
    %97 = vmatprep.subr.bf16.mxu0 0
    %98 = vmatpush1.bf16.msra.mxu0 0
    %99 = vmatprep.subr.bf16.mxu0 0
    %100 = vmatpush1.bf16.msra.mxu0 0
    %101 = vmatprep.subr.bf16.mxu0 0
    %102 = vmatpush1.bf16.msra.mxu0 0
    %103 = vmatprep.subr.bf16.mxu0 0
    %104 = vmatpush1.bf16.msra.mxu0 0
    %105 = vmatprep.subr.bf16.mxu0 0
    %106 = vmatpush1.bf16.msra.mxu0 0
    %107 = vmatprep.subr.bf16.mxu0 0
    %108 = vmatpush1.bf16.msra.mxu0 0
    %109 = vmatprep.subr.bf16.mxu0 0
    %110 = vmatpush1.bf16.msra.mxu0 %v90
    %111 = vmatprep.subr.bf16.mxu0 0
    %112 = vmatpush1.bf16.msra.mxu0 %v89
    %113 = vmatprep.subr.bf16.mxu0 0
    %114 = vmatpush2.bf16.msra.mxu0 0
    %115 = vmatprep.subr.bf16.mxu0 0
    %116 = vmatpush2.bf16.msra.mxu0 0
    %117 = vmatprep.subr.bf16.mxu0 0
    %118 = vmatpush2.bf16.msra.mxu0 0
    %119 = vmatprep.subr.bf16.mxu0 0
    %120 = vmatpush2.bf16.msra.mxu0 0
    %121 = vmatprep.subr.bf16.mxu0 0
    %122 = vmatpush2.bf16.msra.mxu0 0
    %123 = vmatprep.subr.bf16.mxu0 0
    %124 = vmatpush2.bf16.msra.mxu0 0
    %125 = vmatprep.subr.bf16.mxu0 0
    %126 = vmatpush2.bf16.msra.mxu0 0
    %127 = vmatprep.subr.bf16.mxu0 0
    %128 = vmatpush2.bf16.msra.mxu0 0
    %129 = vmatprep.mubr.bf16.mxu0 0
    %130 = vmatmul.mubr.bf16.gmra.mxu0 %v95
    %v131 = vpop.f32.mrf.mxu0
    %v132 = vadd.f32 %v79, %v131
    %v133 = vpop.f32.mrf.mxu0
    %v134 = vpop.f32.mrf.mxu0
    %v135 = vpop.f32.mrf.mxu0
    %136 = vdwg.mxu0
    %v137 = vmax.f32 %v132, 0.0
    %v138 = vpack.c.bf16 %v137, %v137
    %v139 = vld [vmem:[#allocation7] sm:$0xf]
    %v140 = vld [vmem:[#allocation7 + $0x4] sm:$0xf]
    %v141 = vld [vmem:[#allocation7 + $0x8] sm:$0xf]
    %v142 = vld [vmem:[#allocation7 + $0xc] sm:$0xf]
    %v143 = vld [vmem:[#allocation7 + $0x10] sm:$0xf]
    %v144 = vld [vmem:[#allocation7 + $0x14] sm:$0xf]
    %v145 = vld [vmem:[#allocation7 + $0x18] sm:$0xf]
    %v146 = vld [vmem:[#allocation7 + $0x1c] sm:$0xf]
    %v147 = vld [vmem:[#allocation7 + $0x20] sm:$0xf]
    %v148 = vld [vmem:[#allocation7 + $0x24] sm:$0xf]
    %v149 = vld [vmem:[#allocation7 + $0x28] sm:$0xf]
    %v150 = vld [vmem:[#allocation7 + $0x2c] sm:$0xf]
    %v151 = vld [vmem:[#allocation7 + $0x30] sm:$0xf]
    %v152 = vld [vmem:[#allocation7 + $0x34] sm:$0xf]
    %v153 = vld [vmem:[#allocation7 + $0x38] sm:$0xf]
    %v154 = vld [vmem:[#allocation7 + $0x3c] sm:$0xf]
    %v155 = vld [vmem:[%s4] sm:$0x1]
    %v157 = vlaneseq
    %v158 = vshrl.u32 %v157, 7
    %v159 = vsub.s32 0, %v158
    %v160 = vrot.slane %v155, %v159
    %v178 = vunpack.c.l.b16 %v139
    %v179 = vunpack.c.l.b16 %v140
    %v180 = vunpack.c.l.b16 %v141
    %v181 = vunpack.c.l.b16 %v142
    %v182 = vunpack.c.l.b16 %v143
    %v183 = vunpack.c.l.b16 %v144
    %v184 = vunpack.c.l.b16 %v145
    %v185 = vunpack.c.l.b16 %v146
    %v186 = vunpack.c.l.b16 %v147
    %v187 = vunpack.c.l.b16 %v148
    %v188 = vunpack.c.l.b16 %v149
    %v189 = vunpack.c.l.b16 %v150
    %v190 = vunpack.c.l.b16 %v151
    %v191 = vunpack.c.l.b16 %v152
    %v192 = vunpack.c.l.b16 %v153
    %v193 = vunpack.c.l.b16 %v154
    %v194 = vpack.c.b16 %v179, %v178
    %v195 = vpack.c.b16 %v181, %v180
    %v196 = vpack.c.b16 %v183, %v182
    %v197 = vpack.c.b16 %v185, %v184
    %v198 = vpack.c.b16 %v187, %v186
    %v199 = vpack.c.b16 %v189, %v188
    %v200 = vpack.c.b16 %v191, %v190
    %v201 = vpack.c.b16 %v193, %v192
    %210 = vmatprep.subr.bf16.mxu0 0
    %211 = vmatpush1.bf16.msra.mxu0 %v201
    %212 = vmatprep.subr.bf16.mxu0 0
    %213 = vmatpush1.bf16.msra.mxu0 %v200
    %214 = vmatprep.subr.bf16.mxu0 0
    %215 = vmatpush1.bf16.msra.mxu0 %v199
    %216 = vmatprep.subr.bf16.mxu0 0
    %217 = vmatpush1.bf16.msra.mxu0 %v198
    %218 = vmatprep.subr.bf16.mxu0 0
    %219 = vmatpush1.bf16.msra.mxu0 %v197
    %220 = vmatprep.subr.bf16.mxu0 0
    %221 = vmatpush1.bf16.msra.mxu0 %v196
    %222 = vmatprep.subr.bf16.mxu0 0
    %223 = vmatpush1.bf16.msra.mxu0 %v195
    %224 = vmatprep.subr.bf16.mxu0 0
    %225 = vmatpush1.bf16.msra.mxu0 %v194
    %226 = vmatprep.subr.bf16.mxu0 0
    %227 = vmatpush2.bf16.msra.mxu0 0
    %228 = vmatprep.subr.bf16.mxu0 0
    %229 = vmatpush2.bf16.msra.mxu0 0
    %230 = vmatprep.subr.bf16.mxu0 0
    %231 = vmatpush2.bf16.msra.mxu0 0
    %232 = vmatprep.subr.bf16.mxu0 0
    %233 = vmatpush2.bf16.msra.mxu0 0
    %234 = vmatprep.subr.bf16.mxu0 0
    %235 = vmatpush2.bf16.msra.mxu0 0
    %236 = vmatprep.subr.bf16.mxu0 0
    %237 = vmatpush2.bf16.msra.mxu0 0
    %238 = vmatprep.subr.bf16.mxu0 0
    %239 = vmatpush2.bf16.msra.mxu0 0
    %240 = vmatprep.subr.bf16.mxu0 0
    %241 = vmatpush2.bf16.msra.mxu0 0
    %242 = vmatprep.mubr.bf16.mxu0 0
    %243 = vmatmul.mubr.bf16.gmra.mxu0 %v138
    %v244 = vpop.f32.mrf.mxu0
    %v245 = vadd.f32 %v160, %v244
    %v246 = vpop.f32.mrf.mxu0
    %v247 = vpop.f32.mrf.mxu0
    %v248 = vpop.f32.mrf.mxu0
    %249 = vdwg.mxu0
    %v250 = vmax.f32 %v245, 0.0
    %v251 = vld [vmem:[%s5] sm:$0x1]
    %v253 = vlaneseq
    %v254 = vshrl.u32 %v253, 7
    %v255 = vsub.s32 0, %v254
    %v256 = vrot.slane %v251, %v255
    %v258 = vmul.f32 %v250, %v256
    %259 = vadd.xlane.f32.xlu0 %v258
    %v260 = vpop.xlane.xlu0 %259
    %v261 = vld [vmem:[#allocation2] sm:$0x1]
    %v263 = vlaneseq
    %v264 = vshrl.u32 %v263, 7
    %v265 = vsub.s32 0, %v264
    %v266 = vrot.slane %v261, %v265
    %v268 = vadd.f32 %v260, %v266
    %vm269 = vcmask 7168
    %270 = vst.msk [vmem:[%s7] sm:$0xff] %vm269, %v268
    // Predicated region
    $region42: #{tpu_custom_call.1} parent=1 // pred_check
      _
    $region43: #{tpu_custom_call.1} parent=1 // pred_check_branch
      %272 = sbr.rel (0) target = $region45
    $region44: #{tpu_custom_call.1} parent=1 // pred_region
      _
    $region45: #{tpu_custom_call.1} parent=1 // pred_fallthru
      _
    // Predicated region
    $region46: #{tpu_custom_call.1} parent=1 // pred_check
      _
    $region47: #{tpu_custom_call.1} parent=1 // pred_check_branch
      %274 = sbr.rel (0) target = $region49
    $region48: #{tpu_custom_call.1} parent=1 // pred_region
      _
    $region49: #{tpu_custom_call.1} parent=1 // pred_fallthru
      _
    %275 = vsyncpa [#allocation4], 1
    %276 = vsyncpa [#allocation6], 1

</llo_original>
